<compile_context>
chip_gen: v7x
topology: tpu7x:2x2x1
jax: 0.10.0
libtpu: 0.0.40
codegen_flags: <defaults>
</compile_context>

<pallas_src>
import jax
import jax.numpy as jnp
from jax import lax
from jax.experimental import pallas as pl
from jax.experimental.pallas import tpu as pltpu

K = 7          # Conv1d kernel size (both blocks)
STRIDE = 2     # Conv1d stride (both blocks)
C1 = 8         # block1 out_channels
C2 = 16        # block2 out_channels
EPS = 1e-5     # BatchNorm eps (PyTorch default)


def conv_out_len(t):
    return (t - K) // STRIDE + 1


def _round_up(x, m):
    return ((x + m - 1) // m) * m


def _vmem_cap_bytes():
    """Generation-aware VMEM budget (~100 MiB on 128-MiB v5e/v6e, ~50 MiB on
    v7x's 64-MiB TensorCores).  Conservative fallback if the query fails."""
    try:
        phys = int(getattr(pltpu.get_tpu_info(), "vmem_capacity_bytes"))
    except Exception:
        phys = 64 * 1024 * 1024
    return max(int(phys * 0.78), 32 * 1024 * 1024)


# ---------------------------------------------------------------------------
# Pallas kernel: both TCN blocks fused (bf16 MXU matmuls + shift + ReLU)
# ---------------------------------------------------------------------------
def tcn_kernel(x_ref, w1_ref, b1_ref, w2_ref, b2_ref, o_ref):
    # x_ref : (TB, T)         bf16 input rows (time on lanes)
    # w1_ref: (T,  H1P)       bf16 banded conv1 weights, BN1 scale folded, pad=0
    # b1_ref: (1,  H1P)       f32 per-column shift (bias+BN1 folded), pad=0
    # w2_ref: (H1P, OUTP)     bf16 banded conv2 weights, BN2 scale folded, pad=0
    # b2_ref: (1,  OUTP)      f32 shift, pad=0
    # o_ref : (TB, OUTP)      bf16 channel-major flattened output (lane-padded)
    h1 = jnp.dot(x_ref[...], w1_ref[...], preferred_element_type=jnp.float32)
    h1 = jnp.maximum(h1 + b1_ref[...], 0.0)                       # BN1 shift + ReLU
    h2 = jnp.dot(h1.astype(w2_ref.dtype), w2_ref[...],
                 preferred_element_type=jnp.float32)
    o_ref[...] = jnp.maximum(h2 + b2_ref[...], 0.0).astype(o_ref.dtype)  # BN2 + ReLU


# ---------------------------------------------------------------------------
# Parameter setup (glue, plain JAX)
# ---------------------------------------------------------------------------
def init_raw_params(key):
    """Deterministic PyTorch-layout parameters for tcn_Networks."""
    ks = jax.random.split(key, 12)
    w1 = 0.30 * jax.random.normal(ks[0], (C1, 1, K), jnp.float32)   # Conv1d(1, 8, 7)
    b1 = 0.10 * jax.random.normal(ks[1], (C1,), jnp.float32)
    g1 = 1.0 + 0.10 * jax.random.normal(ks[2], (C1,), jnp.float32)  # BN1 gamma
    be1 = 0.05 * jax.random.normal(ks[3], (C1,), jnp.float32)       # BN1 beta
    m1 = 0.10 * jax.random.normal(ks[4], (C1,), jnp.float32)        # BN1 running_mean
    v1 = 1.0 + jax.random.uniform(ks[5], (C1,), jnp.float32)        # BN1 running_var
    w2 = 0.15 * jax.random.normal(ks[6], (C2, C1, K), jnp.float32)  # Conv1d(8, 16, 7)
    b2 = 0.10 * jax.random.normal(ks[7], (C2,), jnp.float32)
    g2 = 1.0 + 0.10 * jax.random.normal(ks[8], (C2,), jnp.float32)
    be2 = 0.05 * jax.random.normal(ks[9], (C2,), jnp.float32)
    m2 = 0.10 * jax.random.normal(ks[10], (C2,), jnp.float32)
    v2 = 1.0 + jax.random.uniform(ks[11], (C2,), jnp.float32)
    return (w1, b1, g1, be1, m1, v1, w2, b2, g2, be2, m2, v2)


def build_kernel_params(raw, T):
    """Fold conv bias + eval-mode BN, lower the strided convs to banded GEMMs,
    fold the BN scale into the weight columns, zero-pad H1 and OUT to multiples
    of 128 (lane-dense pipeline) and cast MXU operands to bf16."""
    (w1, b1, g1, be1, m1, v1, w2, b2, g2, be2, m2, v2) = raw
    T1, T2 = conv_out_len(T), conv_out_len(conv_out_len(T))
    H1 = T1 * C1
    H1P = _round_up(H1, 128)
    OUT = C2 * T2
    OUTP = _round_up(OUT, 128)

    sc1 = g1 / jnp.sqrt(v1 + EPS)
    sh1 = be1 + sc1 * (b1 - m1)
    sc2 = g2 / jnp.sqrt(v2 + EPS)
    sh2 = be2 + sc2 * (b2 - m2)

    # Banded matrix for conv1:  W1[t, t1*C1 + c] = w1[c, 0, t - 2*t1] (valid taps)
    w1_kc = jnp.transpose(w1[:, 0, :], (1, 0))                      # (K, C1)
    t = jnp.arange(T)[:, None]
    t1 = jnp.arange(T1)[None, :]
    k1 = t - STRIDE * t1                                            # (T, T1)
    valid1 = (k1 >= 0) & (k1 < K)
    W1 = jnp.where(valid1[:, :, None], w1_kc[jnp.clip(k1, 0, K - 1)], 0.0)
    W1 = W1.reshape(T, H1)
    W1 = W1 * jnp.tile(sc1, T1)[None, :]        # fold BN1 scale into weights
    b1_row = jnp.tile(sh1, T1)[None, :]                             # (1, H1)

    # Banded matrix for conv2:  W2[t1*C1 + c, d*T2 + t2] = w2[d, c, t1 - 2*t2]
    w2_kcd = jnp.transpose(w2, (2, 1, 0))                           # (K, C1, C2)
    tt1 = jnp.arange(T1)[:, None]
    tt2 = jnp.arange(T2)[None, :]
    k2 = tt1 - STRIDE * tt2                                         # (T1, T2)
    valid2 = (k2 >= 0) & (k2 < K)
    W2 = jnp.where(valid2[:, :, None, None],
                   w2_kcd[jnp.clip(k2, 0, K - 1)], 0.0)             # (T1, T2, C1, C2)
    W2 = jnp.transpose(W2, (0, 2, 3, 1)).reshape(H1, OUT)
    W2 = W2 * jnp.repeat(sc2, T2)[None, :]      # fold BN2 scale into weights
    b2_row = jnp.repeat(sh2, T2)[None, :]                           # (1, OUT)

    # Zero-pad H1 -> H1P.  Pads MUST be zero: ReLU(0 + 0) = 0 contributes
    # nothing to GEMM2 (and W2's padded rows are zero too).
    if H1P != H1:
        W1 = jnp.pad(W1, ((0, 0), (0, H1P - H1)))
        b1_row = jnp.pad(b1_row, ((0, 0), (0, H1P - H1)))
        W2 = jnp.pad(W2, ((0, H1P - H1), (0, 0)))
    # Lane-pad the output dimension to a multiple of 128 (unmasked stores).
    if OUTP != OUT:
        W2 = jnp.pad(W2, ((0, 0), (0, OUTP - OUT)))
        b2_row = jnp.pad(b2_row, ((0, 0), (0, OUTP - OUT)))

    return (W1.astype(jnp.bfloat16), b1_row.astype(jnp.float32),
            W2.astype(jnp.bfloat16), b2_row.astype(jnp.float32))


# ---------------------------------------------------------------------------
# Wrapper: pallas_call with a grid over row-blocks of B = N*V
# ---------------------------------------------------------------------------
def tcn_networks_forward(x, kernel_params, block_rows=1024, trim=True):
    N, V, T = x.shape
    T1, T2 = conv_out_len(T), conv_out_len(conv_out_len(T))
    OUT = C2 * T2
    W1, b1_row, W2, b2_row = kernel_params
    H1P = W1.shape[1]
    OUTP = W2.shape[1]

    B = N * V
    # Row-block sizing: large enough to fill the MXU M-dim and amortize the
    # ~0.35us/step grid overhead, but capped at ceil(B/2) so the grid keeps
    # >= 2 steps when possible (dimension_semantics=("parallel",) can then
    # shard the steps across both v7x TensorCores).  Multiple of 32 for clean
    # bf16 sublane packing.
    TB = min(_round_up(block_rows, 32), max(32, _round_up(-(-B // 2), 32)))
    Bp = _round_up(B, TB)

    xb = x.reshape(B, T).astype(jnp.bfloat16)
    if Bp != B:
        xb = jnp.pad(xb, ((0, Bp - B), (0, 0)))

    def nbytes(a):
        return a.size * a.dtype.itemsize

    # Scoped-VMEM estimate: double-buffered x/out blocks, single-buffered
    # resident weights, plus the per-step h1 intermediate (f32 + bf16 copy).
    weight_bytes = nbytes(W1) + nbytes(b1_row) + nbytes(W2) + nbytes(b2_row)
    vmem_est = (2 * TB * T * 2            # bf16 x blocks (double-buffered)
                + 2 * TB * OUTP * 2       # bf16 out blocks (double-buffered)
                + weight_bytes            # resident weights (single-buffered)
                + TB * H1P * 4            # f32 h1 intermediate
                + TB * H1P * 2)           # bf16 copy of h1 feeding GEMM2
    vmem_cap = _vmem_cap_bytes()
    if vmem_est > vmem_cap:
        # TODO(synk): for very large T the O(T^2) banded weights no longer fit
        #             VMEM; column-tile W2 (second grid axis over OUTP blocks)
        #             or switch block1 to a 7-tap shifted-slice formulation.
        raise ValueError(
            f"banded-GEMM VMEM estimate {vmem_est} B exceeds cap {vmem_cap} B"
            f" (T={T}, block_rows={TB}); reduce block_rows or tile the weights")
    vmem_limit = int(min(vmem_cap, max(vmem_est + (2 << 20), 16 << 20)))

    def _call(single_buffer_weights):
        # Constant index_maps keep the weight tiles resident across grid steps;
        # Buffered(1) additionally avoids allocating a second (pipeline) copy.
        w_kw = {"pipeline_mode": pl.Buffered(1)} if single_buffer_weights else {}
        return pl.pallas_call(
            tcn_kernel,
            out_shape=jax.ShapeDtypeStruct((Bp, OUTP), jnp.bfloat16),
            grid_spec=pltpu.PrefetchScalarGridSpec(
                num_scalar_prefetch=0,
                grid=(Bp // TB,),
                in_specs=[
                    pl.BlockSpec((TB, T), lambda i: (i, 0)),
                    pl.BlockSpec((T, H1P), lambda i: (0, 0), **w_kw),
                    pl.BlockSpec((1, H1P), lambda i: (0, 0), **w_kw),
                    pl.BlockSpec((H1P, OUTP), lambda i: (0, 0), **w_kw),
                    pl.BlockSpec((1, OUTP), lambda i: (0, 0), **w_kw),
                ],
                out_specs=pl.BlockSpec((TB, OUTP), lambda i: (i, 0)),
            ),
            compiler_params=pltpu.CompilerParams(
                dimension_semantics=("parallel",),
                vmem_limit_bytes=vmem_limit),
        )(xb, W1, b1_row, W2, b2_row)

    try:
        out = _call(True)
    except Exception:
        # Fallback if this JAX build rejects single-buffered pipeline_mode;
        # semantics are identical, only the weight double-buffering differs.
        out = _call(False)

    if not trim:
        # Padded (Bp, OUTP) bf16 slab; rows [:B] / cols [:OUT] are valid.
        # Prefer consuming this directly downstream to avoid the trim copy.
        return out

    # Module-faithful view: (B, C2*T2) channel-major per row == torch
    # .view(N, V, -1).  Only slice where padding actually exists.
    if Bp != B:
        out = out[:B]
    if OUTP != OUT:
        out = out[:, :OUT]
    return out.reshape(N, V, OUT)


# ---------------------------------------------------------------------------
# Plain-JAX/XLA reference mirroring the PyTorch module (eval mode, f32)
# ---------------------------------------------------------------------------
def tcn_reference(x, raw):
    (w1, b1, g1, be1, m1, v1, w2, b2, g2, be2, m2, v2) = raw
    N, V, T = x.shape
    h = x.reshape(N * V, 1, T)

    def block(h, w, b, g, be, m, v):
        y = lax.conv_general_dilated(
            h, w, window_strides=(STRIDE,), padding="VALID",
            dimension_numbers=("NCH", "OIH", "NCH"))
        y = y + b[None, :, None]
        y = (y - m[None, :, None]) / jnp.sqrt(v[None, :, None] + EPS)
        y = y * g[None, :, None] + be[None, :, None]
        return jnp.maximum(y, 0.0)      # Dropout == identity in eval mode

    h = block(h, w1, b1, g1, be1, m1, v1)
    h = block(h, w2, b2, g2, be2, m2, v2)
    return h.reshape(N, V, -1)


if __name__ == "__main__":
    key = jax.random.PRNGKey(0)
    pkey, xkey1, xkey2 = jax.random.split(key, 3)

    raw = init_raw_params(pkey)

    # Small shapes consistent with the module: N batches, V nodes, T time steps.
    T = 64
    T2 = conv_out_len(conv_out_len(T))          # 12 -> output feature dim 16*12 = 192
    kparams = build_kernel_params(raw, T)

    # Case 1: tiny (single grid step).  Case 2: B=128 exercises a multi-step grid.
    for (N, V, xkey) in ((2, 4, xkey1), (8, 16, xkey2)):
        x = jax.random.normal(xkey, (N, V, T), dtype=jnp.float32)
        out = jax.block_until_ready(tcn_networks_forward(x, kparams))
        ref = jax.block_until_ready(tcn_reference(x, raw))

        assert out.shape == (N, V, C2 * T2), out.shape
        out_f32 = out.astype(jnp.float32)
        if not jnp.allclose(out_f32, ref, atol=5e-2, rtol=5e-2):
            max_err = float(jnp.max(jnp.abs(out_f32 - ref)))
            raise AssertionError(
                f"mismatch vs reference (N={N}, V={V}), max abs err = {max_err}")

    print("KERNEL_OK")
</pallas_src>

<mosaic_0001>
module attributes {stable_mosaic.version = 11 : i64} {
  func.func @tcn_kernel(%arg0: i32, %arg1: memref<32x64xbf16, #tpu.memory_space<vmem>>, %arg2: memref<64x256xbf16, #tpu.memory_space<vmem>>, %arg3: memref<1x256xf32, #tpu.memory_space<vmem>>, %arg4: memref<256x256xbf16, #tpu.memory_space<vmem>>, %arg5: memref<1x256xf32, #tpu.memory_space<vmem>>, %arg6: memref<32x256xbf16, #tpu.memory_space<vmem>>) attributes {dimension_semantics = [#tpu.dimension_semantics<parallel>], iteration_bounds = array<i64: 1>, scalar_prefetch = 0 : i64, scratch_operands = 0 : i64, tpu.core_type = #tpu.core_type<tc>, window_params = [{transform_indices = @transform_0, window_bounds = array<i64: 32, 64>}, {pipeline_mode = #tpu.pipeline_mode<synchronous>, transform_indices = @transform_1, window_bounds = array<i64: 64, 256>}, {pipeline_mode = #tpu.pipeline_mode<synchronous>, transform_indices = @transform_2, window_bounds = array<i64: 1, 256>}, {pipeline_mode = #tpu.pipeline_mode<synchronous>, transform_indices = @transform_3, window_bounds = array<i64: 256, 256>}, {pipeline_mode = #tpu.pipeline_mode<synchronous>, transform_indices = @transform_4, window_bounds = array<i64: 1, 256>}, {transform_indices = @transform_5, window_bounds = array<i64: 32, 256>}]} {
    %c0 = arith.constant 0 : index
    %c0_0 = arith.constant 0 : index
    %0 = vector.load %arg1[%c0, %c0_0] : memref<32x64xbf16, #tpu.memory_space<vmem>>, vector<32x64xbf16>
    %c0_1 = arith.constant 0 : index
    %c0_2 = arith.constant 0 : index
    %1 = vector.load %arg2[%c0_1, %c0_2] : memref<64x256xbf16, #tpu.memory_space<vmem>>, vector<64x256xbf16>
    %cst = arith.constant dense<0.000000e+00> : vector<32x256xf32>
    %2 = tpu.matmul %0, %1, %cst {dimension_numbers = #tpu.dot_dimension_numbers<[1], [0], [0], [1], [0, 0, 1, 1], [], []>} : vector<32x64xbf16>, vector<64x256xbf16>, vector<32x256xf32> -> vector<32x256xf32>
    %c0_3 = arith.constant 0 : index
    %c0_4 = arith.constant 0 : index
    %3 = vector.load %arg3[%c0_3, %c0_4] : memref<1x256xf32, #tpu.memory_space<vmem>>, vector<1x256xf32>
    %4 = vector.broadcast %3 : vector<1x256xf32> to vector<32x256xf32>
    %5 = arith.addf %2, %4 : vector<32x256xf32>
    %cst_5 = arith.constant 0.000000e+00 : f32
    %6 = vector.broadcast %cst_5 : f32 to vector<32x256xf32>
    %7 = arith.maximumf %5, %6 : vector<32x256xf32>
    %8 = arith.truncf %7 : vector<32x256xf32> to vector<32x256xbf16>
    %c0_6 = arith.constant 0 : index
    %c0_7 = arith.constant 0 : index
    %9 = vector.load %arg4[%c0_6, %c0_7] : memref<256x256xbf16, #tpu.memory_space<vmem>>, vector<256x256xbf16>
    %cst_8 = arith.constant dense<0.000000e+00> : vector<32x256xf32>
    %10 = tpu.matmul %8, %9, %cst_8 {dimension_numbers = #tpu.dot_dimension_numbers<[1], [0], [0], [1], [0, 0, 1, 1], [], []>} : vector<32x256xbf16>, vector<256x256xbf16>, vector<32x256xf32> -> vector<32x256xf32>
    %c0_9 = arith.constant 0 : index
    %c0_10 = arith.constant 0 : index
    %11 = vector.load %arg5[%c0_9, %c0_10] : memref<1x256xf32, #tpu.memory_space<vmem>>, vector<1x256xf32>
    %12 = vector.broadcast %11 : vector<1x256xf32> to vector<32x256xf32>
    %13 = arith.addf %10, %12 : vector<32x256xf32>
    %cst_11 = arith.constant 0.000000e+00 : f32
    %14 = vector.broadcast %cst_11 : f32 to vector<32x256xf32>
    %15 = arith.maximumf %13, %14 : vector<32x256xf32>
    %16 = arith.truncf %15 : vector<32x256xf32> to vector<32x256xbf16>
    %c0_12 = arith.constant 0 : index
    %c0_13 = arith.constant 0 : index
    %17 = vector.load %arg6[%c0_12, %c0_13] : memref<32x256xbf16, #tpu.memory_space<vmem>>, vector<32x256xbf16>
    tpu.vector_store %arg6[%c0_12, %c0_13], %16 {strides = array<i32>} : memref<32x256xbf16, #tpu.memory_space<vmem>>, vector<32x256xbf16>,
    return
  }
  func.func @transform_0(%arg0: i32) -> (i32, i32) {
    %c0_i32 = arith.constant 0 : i32
    %c0_i32_0 = arith.constant 0 : i32
    return %arg0, %c0_i32 : i32, i32
  }
  func.func @transform_1(%arg0: i32) -> (i32, i32) {
    %c0_i32 = arith.constant 0 : i32
    %c0_i32_0 = arith.constant 0 : i32
    %c0_i32_1 = arith.constant 0 : i32
    return %c0_i32, %c0_i32_0 : i32, i32
  }
  func.func @transform_2(%arg0: i32) -> (i32, i32) {
    %c0_i32 = arith.constant 0 : i32
    %c0_i32_0 = arith.constant 0 : i32
    %c0_i32_1 = arith.constant 0 : i32
    return %c0_i32, %c0_i32_0 : i32, i32
  }
  func.func @transform_3(%arg0: i32) -> (i32, i32) {
    %c0_i32 = arith.constant 0 : i32
    %c0_i32_0 = arith.constant 0 : i32
    %c0_i32_1 = arith.constant 0 : i32
    return %c0_i32, %c0_i32_0 : i32, i32
  }
  func.func @transform_4(%arg0: i32) -> (i32, i32) {
    %c0_i32 = arith.constant 0 : i32
    %c0_i32_0 = arith.constant 0 : i32
    %c0_i32_1 = arith.constant 0 : i32
    return %c0_i32, %c0_i32_0 : i32, i32
  }
  func.func @transform_5(%arg0: i32) -> (i32, i32) {
    %c0_i32 = arith.constant 0 : i32
    %c0_i32_0 = arith.constant 0 : i32
    return %arg0, %c0_i32 : i32, i32
  }
}

module attributes {stable_mosaic.version = 11 : i64} {
  func.func @tcn_kernel(%arg0: i32, %arg1: memref<32x64xbf16, #tpu.memory_space<vmem>>, %arg2: memref<64x256xbf16, #tpu.memory_space<vmem>>, %arg3: memref<1x256xf32, #tpu.memory_space<vmem>>, %arg4: memref<256x256xbf16, #tpu.memory_space<vmem>>, %arg5: memref<1x256xf32, #tpu.memory_space<vmem>>, %arg6: memref<32x256xbf16, #tpu.memory_space<vmem>>) attributes {dimension_semantics = [#tpu.dimension_semantics<parallel>], iteration_bounds = array<i64: 1>, scalar_prefetch = 0 : i64, scratch_operands = 0 : i64, tpu.core_type = #tpu.core_type<tc>, window_params = [{transform_indices = @transform_0, window_bounds = array<i64: 32, 64>}, {pipeline_mode = #tpu.pipeline_mode<synchronous>, transform_indices = @transform_1, window_bounds = array<i64: 64, 256>}, {pipeline_mode = #tpu.pipeline_mode<synchronous>, transform_indices = @transform_2, window_bounds = array<i64: 1, 256>}, {pipeline_mode = #tpu.pipeline_mode<synchronous>, transform_indices = @transform_3, window_bounds = array<i64: 256, 256>}, {pipeline_mode = #tpu.pipeline_mode<synchronous>, transform_indices = @transform_4, window_bounds = array<i64: 1, 256>}, {transform_indices = @transform_5, window_bounds = array<i64: 32, 256>}]} {
    %c0 = arith.constant 0 : index
    %c0_0 = arith.constant 0 : index
    %0 = vector.load %arg1[%c0, %c0_0] : memref<32x64xbf16, #tpu.memory_space<vmem>>, vector<32x64xbf16>
    %c0_1 = arith.constant 0 : index
    %c0_2 = arith.constant 0 : index
    %1 = vector.load %arg2[%c0_1, %c0_2] : memref<64x256xbf16, #tpu.memory_space<vmem>>, vector<64x256xbf16>
    %cst = arith.constant dense<0.000000e+00> : vector<32x256xf32>
    %2 = tpu.matmul %0, %1, %cst {dimension_numbers = #tpu.dot_dimension_numbers<[1], [0], [0], [1], [0, 0, 1, 1], [], []>} : vector<32x64xbf16>, vector<64x256xbf16>, vector<32x256xf32> -> vector<32x256xf32>
    %c0_3 = arith.constant 0 : index
    %c0_4 = arith.constant 0 : index
    %3 = vector.load %arg3[%c0_3, %c0_4] : memref<1x256xf32, #tpu.memory_space<vmem>>, vector<1x256xf32>
    %4 = vector.broadcast %3 : vector<1x256xf32> to vector<32x256xf32>
    %5 = arith.addf %2, %4 : vector<32x256xf32>
    %cst_5 = arith.constant 0.000000e+00 : f32
    %6 = vector.broadcast %cst_5 : f32 to vector<32x256xf32>
    %7 = arith.maximumf %5, %6 : vector<32x256xf32>
    %8 = arith.truncf %7 : vector<32x256xf32> to vector<32x256xbf16>
    %c0_6 = arith.constant 0 : index
    %c0_7 = arith.constant 0 : index
    %9 = vector.load %arg4[%c0_6, %c0_7] : memref<256x256xbf16, #tpu.memory_space<vmem>>, vector<256x256xbf16>
    %cst_8 = arith.constant dense<0.000000e+00> : vector<32x256xf32>
    %10 = tpu.matmul %8, %9, %cst_8 {dimension_numbers = #tpu.dot_dimension_numbers<[1], [0], [0], [1], [0, 0, 1, 1], [], []>} : vector<32x256xbf16>, vector<256x256xbf16>, vector<32x256xf32> -> vector<32x256xf32>
    %c0_9 = arith.constant 0 : index
    %c0_10 = arith.constant 0 : index
    %11 = vector.load %arg5[%c0_9, %c0_10] : memref<1x256xf32, #tpu.memory_space<vmem>>, vector<1x256xf32>
    %12 = vector.broadcast %11 : vector<1x256xf32> to vector<32x256xf32>
    %13 = arith.addf %10, %12 : vector<32x256xf32>
    %cst_11 = arith.constant 0.000000e+00 : f32
    %14 = vector.broadcast %cst_11 : f32 to vector<32x256xf32>
    %15 = arith.maximumf %13, %14 : vector<32x256xf32>
    %16 = arith.truncf %15 : vector<32x256xf32> to vector<32x256xbf16>
    %c0_12 = arith.constant 0 : index
    %c0_13 = arith.constant 0 : index
    %17 = vector.load %arg6[%c0_12, %c0_13] : memref<32x256xbf16, #tpu.memory_space<vmem>>, vector<32x256xbf16>
    tpu.vector_store %arg6[%c0_12, %c0_13], %16 {strides = array<i32>} : memref<32x256xbf16, #tpu.memory_space<vmem>>, vector<32x256xbf16>,
    return
  }
  func.func @transform_0(%arg0: i32) -> (i32, i32) {
    %c0_i32 = arith.constant 0 : i32
    %c0_i32_0 = arith.constant 0 : i32
    return %arg0, %c0_i32 : i32, i32
  }
  func.func @transform_1(%arg0: i32) -> (i32, i32) {
    %c0_i32 = arith.constant 0 : i32
    %c0_i32_0 = arith.constant 0 : i32
    %c0_i32_1 = arith.constant 0 : i32
    return %c0_i32, %c0_i32_0 : i32, i32
  }
  func.func @transform_2(%arg0: i32) -> (i32, i32) {
    %c0_i32 = arith.constant 0 : i32
    %c0_i32_0 = arith.constant 0 : i32
    %c0_i32_1 = arith.constant 0 : i32
    return %c0_i32, %c0_i32_0 : i32, i32
  }
  func.func @transform_3(%arg0: i32) -> (i32, i32) {
    %c0_i32 = arith.constant 0 : i32
    %c0_i32_0 = arith.constant 0 : i32
    %c0_i32_1 = arith.constant 0 : i32
    return %c0_i32, %c0_i32_0 : i32, i32
  }
  func.func @transform_4(%arg0: i32) -> (i32, i32) {
    %c0_i32 = arith.constant 0 : i32
    %c0_i32_0 = arith.constant 0 : i32
    %c0_i32_1 = arith.constant 0 : i32
    return %c0_i32, %c0_i32_0 : i32, i32
  }
  func.func @transform_5(%arg0: i32) -> (i32, i32) {
    %c0_i32 = arith.constant 0 : i32
    %c0_i32_0 = arith.constant 0 : i32
    return %arg0, %c0_i32 : i32, i32
  }
}

</mosaic_0001>

<llo_original>
// kernel: tpu_custom_call.1
$region0: #{tpu_custom_call.1}
  #allocation0 [shape = 'u32[]', space=smem, size = 0x4, offset = 0x4, fixed_abs, tag = 'smem constant byte address 0x4 - core index']
  #allocation1 [shape = 'u32[144,128]{1,0:T(1,128)}', space=vmem, size = 0x12000, scoped, tag = 'internal scratch']
  %s0 = inlined_call_operand.hbm [shape: bf16[32,64], index: 0, kind: input, shape index: {}]
  %s1 = inlined_call_operand.hbm [shape: bf16[64,256], index: 1, kind: input, shape index: {}]
  %s2 = inlined_call_operand.vmem [shape: f32[1,256], index: 2, kind: input, shape index: {}]
  %s3 = inlined_call_operand.hbm [shape: bf16[256,256], index: 3, kind: input, shape index: {}]
  %s4 = inlined_call_operand.vmem [shape: f32[1,256], index: 4, kind: input, shape index: {}]
  %s5 = inlined_call_operand.hbm [shape: bf16[32,256], index: 5, kind: output, shape index: {}]
  %s6 = sld [smem:[#allocation0]]
  $region42: #{tpu_custom_call.1} parent=0
    _
  %s8 = ssub.s32 1, %s6
  %s9 = scalar_select 0, %s8, %s6
  $region1: #{tpu_custom_call.1} parent=0
    #allocation2 [shape = 'u8[8192]{0}', space=vmem, size = 0x2000, scoped, tag = 'input window, operand 0, single buffered']
    #allocation3 [shape = 's32[1]{0}', space=sflag, size = 0x4, scoped, tag = 'scoped memory for tpu_custom_call.1']
    #allocation4 [shape = 's32[1]{0}', space=sflag, size = 0x4, scoped, tag = 'scoped memory for tpu_custom_call.1']
    #allocation5 [shape = 'u8[32768]{0}', space=vmem, size = 0x8000, scoped, tag = 'input window, operand 1, single buffered']
    #allocation6 [shape = 's32[1]{0}', space=sflag, size = 0x4, scoped, tag = 'scoped memory for tpu_custom_call.1']
    #allocation7 [shape = 'u8[131072]{0}', space=vmem, size = 0x20000, scoped, tag = 'input window, operand 3, single buffered']
    #allocation8 [shape = 'u8[16384]{0}', space=vmem, size = 0x4000, scoped, tag = 'output window, operand 0, single buffered']
    %10 = vsyncpa [#allocation3], 0
    %11 = vsyncpa [#allocation6], 0
    %12 = vsyncpa [#allocation4], 0
    // Predicated region
    $region2: #{tpu_custom_call.1} parent=1 // pred_check
      _
    $region3: #{tpu_custom_call.1} parent=1 // pred_check_branch
      %14 = sbr.rel (0) target = $region5
    $region4: #{tpu_custom_call.1} parent=1 // pred_region
      %s16 = ssub.s32 256, 256
      %17 = vsyncadd [#allocation3], %s16
      %s18 = sshll.u32 [#allocation2], 4
      %s19 = int_to_ptr.vmem [resolvable:$true] %s18
      %24 = dma.hbm_to_vmem [thread:$0]  %s0, 256, %s19, [#allocation3], 64, 64, 4
    $region5: #{tpu_custom_call.1} parent=1 // pred_fallthru
      _
    // Predicated region
    $region6: #{tpu_custom_call.1} parent=1 // pred_check
      _
    $region7: #{tpu_custom_call.1} parent=1 // pred_check_branch
      %26 = sbr.rel (0) target = $region9
    $region8: #{tpu_custom_call.1} parent=1 // pred_region
      %s28 = ssub.s32 1024, 1024
      %29 = vsyncadd [#allocation6], %s28
      %s30 = sshll.u32 [#allocation5], 4
      %s31 = int_to_ptr.vmem [resolvable:$true] %s30
      %36 = dma.hbm_to_vmem [thread:$0]  %s1, 1024, %s31, [#allocation6], 128, 128, 8
    $region9: #{tpu_custom_call.1} parent=1 // pred_fallthru
      _
    // Predicated region
    $region10: #{tpu_custom_call.1} parent=1 // pred_check
      _
    $region11: #{tpu_custom_call.1} parent=1 // pred_check_branch
      %38 = sbr.rel (0) target = $region13
    $region12: #{tpu_custom_call.1} parent=1 // pred_region
      _
    $region13: #{tpu_custom_call.1} parent=1 // pred_fallthru
      _
    // Predicated region
    $region14: #{tpu_custom_call.1} parent=1 // pred_check
      _
    $region15: #{tpu_custom_call.1} parent=1 // pred_check_branch
      %40 = sbr.rel (0) target = $region17
    $region16: #{tpu_custom_call.1} parent=1 // pred_region
      %s42 = ssub.s32 4096, 4096
      %43 = vsyncadd [#allocation6], %s42
      %s44 = sshll.u32 [#allocation7], 4
      %s45 = int_to_ptr.vmem [resolvable:$true] %s44
      %50 = dma.hbm_to_vmem [thread:$0]  %s3, 4096, %s45, [#allocation6], 128, 128, 8
    $region17: #{tpu_custom_call.1} parent=1 // pred_fallthru
      _
    // Predicated region
    $region18: #{tpu_custom_call.1} parent=1 // pred_check
      _
    $region19: #{tpu_custom_call.1} parent=1 // pred_check_branch
      %52 = sbr.rel (0) target = $region21
    $region20: #{tpu_custom_call.1} parent=1 // pred_region
      _
    $region21: #{tpu_custom_call.1} parent=1 // pred_fallthru
      _
    // Predicated region
    $region22: #{tpu_custom_call.1} parent=1 // pred_check
      _
    $region23: #{tpu_custom_call.1} parent=1 // pred_check_branch
      %54 = sbr.rel (0) target = $region25
    $region24: #{tpu_custom_call.1} parent=1 // pred_region
      %55 = dma.done [#allocation3], 256
    $region25: #{tpu_custom_call.1} parent=1 // pred_fallthru
      _
    // Predicated region
    $region26: #{tpu_custom_call.1} parent=1 // pred_check
      _
    $region27: #{tpu_custom_call.1} parent=1 // pred_check_branch
      %57 = sbr.rel (0) target = $region29
    $region28: #{tpu_custom_call.1} parent=1 // pred_region
      %58 = dma.done [#allocation6], 1024
    $region29: #{tpu_custom_call.1} parent=1 // pred_fallthru
      _
    // Predicated region
    $region30: #{tpu_custom_call.1} parent=1 // pred_check
      _
    $region31: #{tpu_custom_call.1} parent=1 // pred_check_branch
      %60 = sbr.rel (0) target = $region33
    $region32: #{tpu_custom_call.1} parent=1 // pred_region
      %61 = dma.done [#allocation6], 4096
    $region33: #{tpu_custom_call.1} parent=1 // pred_fallthru
      _
    %v63 = vld [vmem:[#allocation2] sm:$0xf]
    %v64 = vld [vmem:[#allocation2 + $0x4] sm:$0xf]
    %v65 = vld [vmem:[#allocation2 + $0x8] sm:$0xf]
    %v66 = vld [vmem:[#allocation2 + $0xc] sm:$0xf]
    %v67 = vld [vmem:[#allocation5] sm:$0xff]
    %v68 = vld [vmem:[#allocation5 + $0x8] sm:$0xff]
    %v69 = vld [vmem:[#allocation5 + $0x10] sm:$0xff]
    %v70 = vld [vmem:[#allocation5 + $0x18] sm:$0xff]
    %v71 = vld [vmem:[#allocation5 + $0x20] sm:$0xff]
    %v72 = vld [vmem:[#allocation5 + $0x28] sm:$0xff]
    %v73 = vld [vmem:[#allocation5 + $0x30] sm:$0xff]
    %v74 = vld [vmem:[#allocation5 + $0x38] sm:$0xff]
    %v75 = vld [vmem:[%s2] sm:$0x3]
    %v77 = vlaneseq
    %v78 = vshrl.u32 %v77, 7
    %v79 = vsub.s32 0, %v78
    %v80 = vrot.slane %v75, %v79
    %v81 = vlaneseq
    %v82 = vshrl.u32 %v81, 7
    %v83 = vsub.s32 1, %v82
    %v84 = vrot.slane %v75, %v83
    %v91 = vunpack.c.l.b16 %v63
    %v92 = vunpack.c.l.b16 %v64
    %v93 = vunpack.c.l.b16 %v65
    %v94 = vunpack.c.l.b16 %v66
    %v95 = vpack.c.b16 %v92, %v91
    %v96 = vpack.c.b16 %v94, %v93
    %v105 = vunpack.c.l.b16 %v67
    %v106 = vunpack.c.h.b16 %v67
    %v107 = vunpack.c.l.b16 %v68
    %v108 = vunpack.c.h.b16 %v68
    %v109 = vunpack.c.l.b16 %v69
    %v110 = vunpack.c.h.b16 %v69
    %v111 = vunpack.c.l.b16 %v70
    %v112 = vunpack.c.h.b16 %v70
    %v113 = vunpack.c.l.b16 %v71
    %v114 = vunpack.c.h.b16 %v71
    %v115 = vunpack.c.l.b16 %v72
    %v116 = vunpack.c.h.b16 %v72
    %v117 = vunpack.c.l.b16 %v73
    %v118 = vunpack.c.h.b16 %v73
    %v119 = vunpack.c.l.b16 %v74
    %v120 = vunpack.c.h.b16 %v74
    %v121 = vpack.c.b16 %v107, %v105
    %v122 = vpack.c.b16 %v108, %v106
    %v123 = vpack.c.b16 %v111, %v109
    %v124 = vpack.c.b16 %v112, %v110
    %v125 = vpack.c.b16 %v115, %v113
    %v126 = vpack.c.b16 %v116, %v114
    %v127 = vpack.c.b16 %v119, %v117
    %v128 = vpack.c.b16 %v120, %v118
    %vm137 = vcmask 523264
    %v139 = vsel %vm137, %v95, 0
    %v142 = vsel %vm137, %v96, 0
    %144 = vmatprep.subr.bf16.mxu0 %v122
    %145 = vmatpush1.bf16.msra.mxu0 %v121
    %146 = vmatprep.subr.bf16.mxu0 %v124
    %147 = vmatpush1.bf16.msra.mxu0 %v123
    %148 = vmatprep.subr.bf16.mxu0 %v126
    %149 = vmatpush1.bf16.msra.mxu0 %v125
    %150 = vmatprep.subr.bf16.mxu0 %v128
    %151 = vmatpush1.bf16.msra.mxu0 %v127
    %152 = vmatprep.subr.bf16.mxu0 0
    %153 = vmatpush1.bf16.msra.mxu0 0
    %154 = vmatprep.subr.bf16.mxu0 0
    %155 = vmatpush1.bf16.msra.mxu0 0
    %156 = vmatprep.subr.bf16.mxu0 0
    %157 = vmatpush1.bf16.msra.mxu0 0
    %158 = vmatprep.subr.bf16.mxu0 0
    %159 = vmatpush1.bf16.msra.mxu0 0
    %160 = vmatprep.subr.bf16.mxu0 0
    %161 = vmatpush1.bf16.msra.mxu0 0
    %162 = vmatprep.subr.bf16.mxu0 0
    %163 = vmatpush1.bf16.msra.mxu0 0
    %164 = vmatprep.subr.bf16.mxu0 0
    %165 = vmatpush1.bf16.msra.mxu0 0
    %166 = vmatprep.subr.bf16.mxu0 0
    %167 = vmatpush1.bf16.msra.mxu0 0
    %168 = vmatprep.subr.bf16.mxu0 0
    %169 = vmatpush1.bf16.msra.mxu0 0
    %170 = vmatprep.subr.bf16.mxu0 0
    %171 = vmatpush1.bf16.msra.mxu0 0
    %172 = vmatprep.subr.bf16.mxu0 0
    %173 = vmatpush1.bf16.msra.mxu0 0
    %174 = vmatprep.subr.bf16.mxu0 0
    %175 = vmatpush1.bf16.msra.mxu0 0
    %176 = vmatprep.mubr.bf16.mxu0 0
    %177 = vmatmul.mubr.bf16.gmra.mrb[0].mxu0 %v139
    %v178 = vpop.f32.mrb[0].mxu0
    %v179 = vadd.f32 %v80, %v178
    %v180 = vpop.f32.mrb[0].mxu0
    %v181 = vadd.f32 %v84, %v180
    %v182 = vpop.f32.mrb[0].mxu0
    %v183 = vadd.f32 %v80, %v182
    %v184 = vpop.f32.mrb[0].mxu0
    %v185 = vadd.f32 %v84, %v184
    %186 = vmatprep.mubr.bf16.mxu0 0
    %187 = vmatmul.mubr.bf16.gmra.mrb[0].mxu0 %v142
    %v188 = vpop.f32.mrb[0].mxu0
    %v189 = vadd.f32 %v80, %v188
    %v190 = vpop.f32.mrb[0].mxu0
    %v191 = vadd.f32 %v84, %v190
    %v192 = vpop.f32.mrb[0].mxu0
    %v193 = vadd.f32 %v80, %v192
    %v194 = vpop.f32.mrb[0].mxu0
    %v195 = vadd.f32 %v84, %v194
    %196 = vdwg.mxu0
    %v197 = vmax.f32 %v179, 0.0
    %v198 = vmax.f32 %v181, 0.0
    %v199 = vmax.f32 %v183, 0.0
    %v200 = vmax.f32 %v185, 0.0
    %v201 = vmax.f32 %v189, 0.0
    %v202 = vmax.f32 %v191, 0.0
    %v203 = vmax.f32 %v193, 0.0
    %v204 = vmax.f32 %v195, 0.0
    %v205 = vpack.c.bf16 %v199, %v197
    %v206 = vpack.c.bf16 %v200, %v198
    %v207 = vpack.c.bf16 %v203, %v201
    %v208 = vpack.c.bf16 %v204, %v202
    %v209 = vld [vmem:[#allocation7] sm:$0xff]
    %v210 = vld [vmem:[#allocation7 + $0x8] sm:$0xff]
    %v211 = vld [vmem:[#allocation7 + $0x10] sm:$0xff]
    %v212 = vld [vmem:[#allocation7 + $0x18] sm:$0xff]
    %v213 = vld [vmem:[#allocation7 + $0x20] sm:$0xff]
    %v214 = vld [vmem:[#allocation7 + $0x28] sm:$0xff]
    %v215 = vld [vmem:[#allocation7 + $0x30] sm:$0xff]
    %v216 = vld [vmem:[#allocation7 + $0x38] sm:$0xff]
    %v217 = vld [vmem:[#allocation7 + $0x40] sm:$0xff]
    %v218 = vld [vmem:[#allocation7 + $0x48] sm:$0xff]
    %v219 = vld [vmem:[#allocation7 + $0x50] sm:$0xff]
    %v220 = vld [vmem:[#allocation7 + $0x58] sm:$0xff]
    %v221 = vld [vmem:[#allocation7 + $0x60] sm:$0xff]
    %v222 = vld [vmem:[#allocation7 + $0x68] sm:$0xff]
    %v223 = vld [vmem:[#allocation7 + $0x70] sm:$0xff]
    %v224 = vld [vmem:[#allocation7 + $0x78] sm:$0xff]
    %v225 = vld [vmem:[#allocation7 + $0x80] sm:$0xff]
    %v226 = vld [vmem:[#allocation7 + $0x88] sm:$0xff]
    %v227 = vld [vmem:[#allocation7 + $0x90] sm:$0xff]
    %v228 = vld [vmem:[#allocation7 + $0x98] sm:$0xff]
    %v229 = vld [vmem:[#allocation7 + $0xa0] sm:$0xff]
    %v230 = vld [vmem:[#allocation7 + $0xa8] sm:$0xff]
    %v231 = vld [vmem:[#allocation7 + $0xb0] sm:$0xff]
    %v232 = vld [vmem:[#allocation7 + $0xb8] sm:$0xff]
    %v233 = vld [vmem:[#allocation7 + $0xc0] sm:$0xff]
    %v234 = vld [vmem:[#allocation7 + $0xc8] sm:$0xff]
    %v235 = vld [vmem:[#allocation7 + $0xd0] sm:$0xff]
    %v236 = vld [vmem:[#allocation7 + $0xd8] sm:$0xff]
    %v237 = vld [vmem:[#allocation7 + $0xe0] sm:$0xff]
    %v238 = vld [vmem:[#allocation7 + $0xe8] sm:$0xff]
    %v239 = vld [vmem:[#allocation7 + $0xf0] sm:$0xff]
    %v240 = vld [vmem:[#allocation7 + $0xf8] sm:$0xff]
    %v241 = vld [vmem:[%s4] sm:$0x3]
    %v243 = vlaneseq
    %v244 = vshrl.u32 %v243, 7
    %v245 = vsub.s32 0, %v244
    %v246 = vrot.slane %v241, %v245
    %v247 = vlaneseq
    %v248 = vshrl.u32 %v247, 7
    %v249 = vsub.s32 1, %v248
    %v250 = vrot.slane %v241, %v249
    %v285 = vunpack.c.l.b16 %v209
    %v286 = vunpack.c.h.b16 %v209
    %v287 = vunpack.c.l.b16 %v210
    %v288 = vunpack.c.h.b16 %v210
    %v289 = vunpack.c.l.b16 %v211
    %v290 = vunpack.c.h.b16 %v211
    %v291 = vunpack.c.l.b16 %v212
    %v292 = vunpack.c.h.b16 %v212
    %v293 = vunpack.c.l.b16 %v213
    %v294 = vunpack.c.h.b16 %v213
    %v295 = vunpack.c.l.b16 %v214
    %v296 = vunpack.c.h.b16 %v214
    %v297 = vunpack.c.l.b16 %v215
    %v298 = vunpack.c.h.b16 %v215
    %v299 = vunpack.c.l.b16 %v216
    %v300 = vunpack.c.h.b16 %v216
    %v301 = vunpack.c.l.b16 %v217
    %v302 = vunpack.c.h.b16 %v217
    %v303 = vunpack.c.l.b16 %v218
    %v304 = vunpack.c.h.b16 %v218
    %v305 = vunpack.c.l.b16 %v219
    %v306 = vunpack.c.h.b16 %v219
    %v307 = vunpack.c.l.b16 %v220
    %v308 = vunpack.c.h.b16 %v220
    %v309 = vunpack.c.l.b16 %v221
    %v310 = vunpack.c.h.b16 %v221
    %v311 = vunpack.c.l.b16 %v222
    %v312 = vunpack.c.h.b16 %v222
    %v313 = vunpack.c.l.b16 %v223
    %v314 = vunpack.c.h.b16 %v223
    %v315 = vunpack.c.l.b16 %v224
    %v316 = vunpack.c.h.b16 %v224
    %v317 = vunpack.c.l.b16 %v225
    %v318 = vunpack.c.h.b16 %v225
    %v319 = vunpack.c.l.b16 %v226
    %v320 = vunpack.c.h.b16 %v226
    %v321 = vunpack.c.l.b16 %v227
    %v322 = vunpack.c.h.b16 %v227
    %v323 = vunpack.c.l.b16 %v228
    %v324 = vunpack.c.h.b16 %v228
    %v325 = vunpack.c.l.b16 %v229
    %v326 = vunpack.c.h.b16 %v229
    %v327 = vunpack.c.l.b16 %v230
    %v328 = vunpack.c.h.b16 %v230
    %v329 = vunpack.c.l.b16 %v231
    %v330 = vunpack.c.h.b16 %v231
    %v331 = vunpack.c.l.b16 %v232
    %v332 = vunpack.c.h.b16 %v232
    %v333 = vunpack.c.l.b16 %v233
    %v334 = vunpack.c.h.b16 %v233
    %v335 = vunpack.c.l.b16 %v234
    %v336 = vunpack.c.h.b16 %v234
    %v337 = vunpack.c.l.b16 %v235
    %v338 = vunpack.c.h.b16 %v235
    %v339 = vunpack.c.l.b16 %v236
    %v340 = vunpack.c.h.b16 %v236
    %v341 = vunpack.c.l.b16 %v237
    %v342 = vunpack.c.h.b16 %v237
    %v343 = vunpack.c.l.b16 %v238
    %v344 = vunpack.c.h.b16 %v238
    %v345 = vunpack.c.l.b16 %v239
    %v346 = vunpack.c.h.b16 %v239
    %v347 = vunpack.c.l.b16 %v240
    %v348 = vunpack.c.h.b16 %v240
    %v349 = vpack.c.b16 %v287, %v285
    %v350 = vpack.c.b16 %v288, %v286
    %v351 = vpack.c.b16 %v291, %v289
    %v352 = vpack.c.b16 %v292, %v290
    %v353 = vpack.c.b16 %v295, %v293
    %v354 = vpack.c.b16 %v296, %v294
    %v355 = vpack.c.b16 %v299, %v297
    %v356 = vpack.c.b16 %v300, %v298
    %v357 = vpack.c.b16 %v303, %v301
    %v358 = vpack.c.b16 %v304, %v302
    %v359 = vpack.c.b16 %v307, %v305
    %v360 = vpack.c.b16 %v308, %v306
    %v361 = vpack.c.b16 %v311, %v309
    %v362 = vpack.c.b16 %v312, %v310
    %v363 = vpack.c.b16 %v315, %v313
    %v364 = vpack.c.b16 %v316, %v314
    %v365 = vpack.c.b16 %v319, %v317
    %v366 = vpack.c.b16 %v320, %v318
    %v367 = vpack.c.b16 %v323, %v321
    %v368 = vpack.c.b16 %v324, %v322
    %v369 = vpack.c.b16 %v327, %v325
    %v370 = vpack.c.b16 %v328, %v326
    %v371 = vpack.c.b16 %v331, %v329
    %v372 = vpack.c.b16 %v332, %v330
    %v373 = vpack.c.b16 %v335, %v333
    %v374 = vpack.c.b16 %v336, %v334
    %v375 = vpack.c.b16 %v339, %v337
    %v376 = vpack.c.b16 %v340, %v338
    %v377 = vpack.c.b16 %v343, %v341
    %v378 = vpack.c.b16 %v344, %v342
    %v379 = vpack.c.b16 %v347, %v345
    %v380 = vpack.c.b16 %v348, %v346
    %413 = vmatprep.subr.bf16.mxu0 %v350
    %414 = vmatpush1.bf16.msra.mxu0 %v349
    %415 = vmatprep.subr.bf16.mxu0 %v352
    %416 = vmatpush1.bf16.msra.mxu0 %v351
    %417 = vmatprep.subr.bf16.mxu0 %v354
    %418 = vmatpush1.bf16.msra.mxu0 %v353
    %419 = vmatprep.subr.bf16.mxu0 %v356
    %420 = vmatpush1.bf16.msra.mxu0 %v355
    %421 = vmatprep.subr.bf16.mxu0 %v358
    %422 = vmatpush1.bf16.msra.mxu0 %v357
    %423 = vmatprep.subr.bf16.mxu0 %v360
    %424 = vmatpush1.bf16.msra.mxu0 %v359
    %425 = vmatprep.subr.bf16.mxu0 %v362
    %426 = vmatpush1.bf16.msra.mxu0 %v361
    %427 = vmatprep.subr.bf16.mxu0 %v364
    %428 = vmatpush1.bf16.msra.mxu0 %v363
    %429 = vmatprep.subr.bf16.mxu0 %v366
    %430 = vmatpush1.bf16.msra.mxu0 %v365
    %431 = vmatprep.subr.bf16.mxu0 %v368
    %432 = vmatpush1.bf16.msra.mxu0 %v367
    %433 = vmatprep.subr.bf16.mxu0 %v370
    %434 = vmatpush1.bf16.msra.mxu0 %v369
    %435 = vmatprep.subr.bf16.mxu0 %v372
    %436 = vmatpush1.bf16.msra.mxu0 %v371
    %437 = vmatprep.subr.bf16.mxu0 %v374
    %438 = vmatpush1.bf16.msra.mxu0 %v373
    %439 = vmatprep.subr.bf16.mxu0 %v376
    %440 = vmatpush1.bf16.msra.mxu0 %v375
    %441 = vmatprep.subr.bf16.mxu0 %v378
    %442 = vmatpush1.bf16.msra.mxu0 %v377
    %443 = vmatprep.subr.bf16.mxu0 %v380
    %444 = vmatpush1.bf16.msra.mxu0 %v379
    %445 = vmatprep.mubr.bf16.mxu0 %v206
    %446 = vmatmul.mubr.bf16.gmra.mrb[0].mxu0 %v205
    %v447 = vpop.f32.mrb[0].mxu0
    %v448 = vadd.f32 %v246, %v447
    %v449 = vpop.f32.mrb[0].mxu0
    %v450 = vadd.f32 %v250, %v449
    %v451 = vpop.f32.mrb[0].mxu0
    %v452 = vadd.f32 %v246, %v451
    %v453 = vpop.f32.mrb[0].mxu0
    %v454 = vadd.f32 %v250, %v453
    %455 = vmatprep.mubr.bf16.mxu0 %v208
    %456 = vmatmul.mubr.bf16.gmra.mrb[0].mxu0 %v207
    %v457 = vpop.f32.mrb[0].mxu0
    %v458 = vadd.f32 %v246, %v457
    %v459 = vpop.f32.mrb[0].mxu0
    %v460 = vadd.f32 %v250, %v459
    %v461 = vpop.f32.mrb[0].mxu0
    %v462 = vadd.f32 %v246, %v461
    %v463 = vpop.f32.mrb[0].mxu0
    %v464 = vadd.f32 %v250, %v463
    %465 = vdwg.mxu0
    %v466 = vmax.f32 %v448, 0.0
    %v467 = vmax.f32 %v450, 0.0
    %v468 = vmax.f32 %v452, 0.0
    %v469 = vmax.f32 %v454, 0.0
    %v470 = vmax.f32 %v458, 0.0
    %v471 = vmax.f32 %v460, 0.0
    %v472 = vmax.f32 %v462, 0.0
    %v473 = vmax.f32 %v464, 0.0
    %v474 = vpack.c.bf16 %v468, %v466
    %v475 = vpack.c.bf16 %v469, %v467
    %v476 = vpack.c.bf16 %v472, %v470
    %v477 = vpack.c.bf16 %v473, %v471
    %v482 = vunpack.c.l.b16 %v474
    %v483 = vunpack.c.l.b16 %v475
    %v484 = vunpack.c.h.b16 %v474
    %v485 = vunpack.c.h.b16 %v475
    %v486 = vunpack.c.l.b16 %v476
    %v487 = vunpack.c.l.b16 %v477
    %v488 = vunpack.c.h.b16 %v476
    %v489 = vunpack.c.h.b16 %v477
    %v490 = vpack.c.b16 %v483, %v482
    %v491 = vpack.c.b16 %v485, %v484
    %v492 = vpack.c.b16 %v487, %v486
    %v493 = vpack.c.b16 %v489, %v488
    %498 = vst [vmem:[#allocation8] sm:$0xff] %v490
    %499 = vst [vmem:[#allocation8 + $0x8] sm:$0xff] %v491
    %500 = vst [vmem:[#allocation8 + $0x10] sm:$0xff] %v492
    %501 = vst [vmem:[#allocation8 + $0x18] sm:$0xff] %v493
    // Predicated region
    $region34: #{tpu_custom_call.1} parent=1 // pred_check
      _
    $region35: #{tpu_custom_call.1} parent=1 // pred_check_branch
      %503 = sbr.rel (0) target = $region37
    $region36: #{tpu_custom_call.1} parent=1 // pred_region
      %s505 = ssub.s32 512, 512
      %506 = vsyncadd [#allocation4], %s505
      %s507 = sshll.u32 [#allocation8], 4
      %s508 = int_to_ptr.vmem [resolvable:$true] %s507
      %513 = dma.vmem_to_hbm [thread:$0]  %s508, 512, %s5, [#allocation4], 128, 128, 8
    $region37: #{tpu_custom_call.1} parent=1 // pred_fallthru
      _
    // Predicated region
    $region38: #{tpu_custom_call.1} parent=1 // pred_check
      _
    $region39: #{tpu_custom_call.1} parent=1 // pred_check_branch
      %515 = sbr.rel (0) target = $region41
    $region40: #{tpu_custom_call.1} parent=1 // pred_region
      %516 = dma.done [#allocation4], 512
    $region41: #{tpu_custom_call.1} parent=1 // pred_fallthru
      _
    %517 = vsyncpa [#allocation3], 1
    %518 = vsyncpa [#allocation6], 1
    %519 = vsyncpa [#allocation4], 1

// kernel: tpu_custom_call.1
$region0: #{tpu_custom_call.1}
  #allocation0 [shape = 'u32[]', space=smem, size = 0x4, offset = 0x4, fixed_abs, tag = 'smem constant byte address 0x4 - core index']
  #allocation1 [shape = 'u32[144,128]{1,0:T(1,128)}', space=vmem, size = 0x12000, scoped, tag = 'internal scratch']
  %s0 = inlined_call_operand.hbm [shape: bf16[32,64], index: 0, kind: input, shape index: {}]
  %s1 = inlined_call_operand.hbm [shape: bf16[64,256], index: 1, kind: input, shape index: {}]
  %s2 = inlined_call_operand.vmem [shape: f32[1,256], index: 2, kind: input, shape index: {}]
  %s3 = inlined_call_operand.hbm [shape: bf16[256,256], index: 3, kind: input, shape index: {}]
  %s4 = inlined_call_operand.vmem [shape: f32[1,256], index: 4, kind: input, shape index: {}]
  %s5 = inlined_call_operand.hbm [shape: bf16[32,256], index: 5, kind: output, shape index: {}]
  %s6 = sld [smem:[#allocation0]]
  $region42: #{tpu_custom_call.1} parent=0
    _
  %s8 = ssub.s32 1, %s6
  %s9 = scalar_select 0, %s8, %s6
  $region1: #{tpu_custom_call.1} parent=0
    #allocation2 [shape = 'u8[8192]{0}', space=vmem, size = 0x2000, scoped, tag = 'input window, operand 0, single buffered']
    #allocation3 [shape = 's32[1]{0}', space=sflag, size = 0x4, scoped, tag = 'scoped memory for tpu_custom_call.1']
    #allocation4 [shape = 's32[1]{0}', space=sflag, size = 0x4, scoped, tag = 'scoped memory for tpu_custom_call.1']
    #allocation5 [shape = 'u8[32768]{0}', space=vmem, size = 0x8000, scoped, tag = 'input window, operand 1, single buffered']
    #allocation6 [shape = 's32[1]{0}', space=sflag, size = 0x4, scoped, tag = 'scoped memory for tpu_custom_call.1']
    #allocation7 [shape = 'u8[131072]{0}', space=vmem, size = 0x20000, scoped, tag = 'input window, operand 3, single buffered']
    #allocation8 [shape = 'u8[16384]{0}', space=vmem, size = 0x4000, scoped, tag = 'output window, operand 0, single buffered']
    %10 = vsyncpa [#allocation3], 0
    %11 = vsyncpa [#allocation6], 0
    %12 = vsyncpa [#allocation4], 0
    // Predicated region
    $region2: #{tpu_custom_call.1} parent=1 // pred_check
      _
    $region3: #{tpu_custom_call.1} parent=1 // pred_check_branch
      %14 = sbr.rel (0) target = $region5
    $region4: #{tpu_custom_call.1} parent=1 // pred_region
      %s16 = ssub.s32 256, 256
      %17 = vsyncadd [#allocation3], %s16
      %s18 = sshll.u32 [#allocation2], 4
      %s19 = int_to_ptr.vmem [resolvable:$true] %s18
      %24 = dma.hbm_to_vmem [thread:$0]  %s0, 256, %s19, [#allocation3], 64, 64, 4
    $region5: #{tpu_custom_call.1} parent=1 // pred_fallthru
      _
    // Predicated region
    $region6: #{tpu_custom_call.1} parent=1 // pred_check
      _
    $region7: #{tpu_custom_call.1} parent=1 // pred_check_branch
      %26 = sbr.rel (0) target = $region9
    $region8: #{tpu_custom_call.1} parent=1 // pred_region
      %s28 = ssub.s32 1024, 1024
      %29 = vsyncadd [#allocation6], %s28
      %s30 = sshll.u32 [#allocation5], 4
      %s31 = int_to_ptr.vmem [resolvable:$true] %s30
      %36 = dma.hbm_to_vmem [thread:$0]  %s1, 1024, %s31, [#allocation6], 128, 128, 8
    $region9: #{tpu_custom_call.1} parent=1 // pred_fallthru
      _
    // Predicated region
    $region10: #{tpu_custom_call.1} parent=1 // pred_check
      _
    $region11: #{tpu_custom_call.1} parent=1 // pred_check_branch
      %38 = sbr.rel (0) target = $region13
    $region12: #{tpu_custom_call.1} parent=1 // pred_region
      _
    $region13: #{tpu_custom_call.1} parent=1 // pred_fallthru
      _
    // Predicated region
    $region14: #{tpu_custom_call.1} parent=1 // pred_check
      _
    $region15: #{tpu_custom_call.1} parent=1 // pred_check_branch
      %40 = sbr.rel (0) target = $region17
    $region16: #{tpu_custom_call.1} parent=1 // pred_region
      %s42 = ssub.s32 4096, 4096
      %43 = vsyncadd [#allocation6], %s42
      %s44 = sshll.u32 [#allocation7], 4
      %s45 = int_to_ptr.vmem [resolvable:$true] %s44
      %50 = dma.hbm_to_vmem [thread:$0]  %s3, 4096, %s45, [#allocation6], 128, 128, 8
    $region17: #{tpu_custom_call.1} parent=1 // pred_fallthru
      _
    // Predicated region
    $region18: #{tpu_custom_call.1} parent=1 // pred_check
      _
    $region19: #{tpu_custom_call.1} parent=1 // pred_check_branch
      %52 = sbr.rel (0) target = $region21
    $region20: #{tpu_custom_call.1} parent=1 // pred_region
      _
    $region21: #{tpu_custom_call.1} parent=1 // pred_fallthru
      _
    // Predicated region
    $region22: #{tpu_custom_call.1} parent=1 // pred_check
      _
    $region23: #{tpu_custom_call.1} parent=1 // pred_check_branch
      %54 = sbr.rel (0) target = $region25
    $region24: #{tpu_custom_call.1} parent=1 // pred_region
      %55 = dma.done [#allocation3], 256
    $region25: #{tpu_custom_call.1} parent=1 // pred_fallthru
      _
    // Predicated region
    $region26: #{tpu_custom_call.1} parent=1 // pred_check
      _
    $region27: #{tpu_custom_call.1} parent=1 // pred_check_branch
      %57 = sbr.rel (0) target = $region29
    $region28: #{tpu_custom_call.1} parent=1 // pred_region
      %58 = dma.done [#allocation6], 1024
    $region29: #{tpu_custom_call.1} parent=1 // pred_fallthru
      _
    // Predicated region
    $region30: #{tpu_custom_call.1} parent=1 // pred_check
      _
    $region31: #{tpu_custom_call.1} parent=1 // pred_check_branch
      %60 = sbr.rel (0) target = $region33
    $region32: #{tpu_custom_call.1} parent=1 // pred_region
      %61 = dma.done [#allocation6], 4096
    $region33: #{tpu_custom_call.1} parent=1 // pred_fallthru
      _
    %v63 = vld [vmem:[#allocation2] sm:$0xf]
    %v64 = vld [vmem:[#allocation2 + $0x4] sm:$0xf]
    %v65 = vld [vmem:[#allocation2 + $0x8] sm:$0xf]
    %v66 = vld [vmem:[#allocation2 + $0xc] sm:$0xf]
    %v67 = vld [vmem:[#allocation5] sm:$0xff]
    %v68 = vld [vmem:[#allocation5 + $0x8] sm:$0xff]
    %v69 = vld [vmem:[#allocation5 + $0x10] sm:$0xff]
    %v70 = vld [vmem:[#allocation5 + $0x18] sm:$0xff]
    %v71 = vld [vmem:[#allocation5 + $0x20] sm:$0xff]
    %v72 = vld [vmem:[#allocation5 + $0x28] sm:$0xff]
    %v73 = vld [vmem:[#allocation5 + $0x30] sm:$0xff]
    %v74 = vld [vmem:[#allocation5 + $0x38] sm:$0xff]
    %v75 = vld [vmem:[%s2] sm:$0x3]
    %v77 = vlaneseq
    %v78 = vshrl.u32 %v77, 7
    %v79 = vsub.s32 0, %v78
    %v80 = vrot.slane %v75, %v79
    %v81 = vlaneseq
    %v82 = vshrl.u32 %v81, 7
    %v83 = vsub.s32 1, %v82
    %v84 = vrot.slane %v75, %v83
    %v91 = vunpack.c.l.b16 %v63
    %v92 = vunpack.c.l.b16 %v64
    %v93 = vunpack.c.l.b16 %v65
    %v94 = vunpack.c.l.b16 %v66
    %v95 = vpack.c.b16 %v92, %v91
    %v96 = vpack.c.b16 %v94, %v93
    %v105 = vunpack.c.l.b16 %v67
    %v106 = vunpack.c.h.b16 %v67
    %v107 = vunpack.c.l.b16 %v68
    %v108 = vunpack.c.h.b16 %v68
    %v109 = vunpack.c.l.b16 %v69
    %v110 = vunpack.c.h.b16 %v69
    %v111 = vunpack.c.l.b16 %v70
    %v112 = vunpack.c.h.b16 %v70
    %v113 = vunpack.c.l.b16 %v71
    %v114 = vunpack.c.h.b16 %v71
    %v115 = vunpack.c.l.b16 %v72
    %v116 = vunpack.c.h.b16 %v72
    %v117 = vunpack.c.l.b16 %v73
    %v118 = vunpack.c.h.b16 %v73
    %v119 = vunpack.c.l.b16 %v74
    %v120 = vunpack.c.h.b16 %v74
    %v121 = vpack.c.b16 %v107, %v105
    %v122 = vpack.c.b16 %v108, %v106
    %v123 = vpack.c.b16 %v111, %v109
    %v124 = vpack.c.b16 %v112, %v110
    %v125 = vpack.c.b16 %v115, %v113
    %v126 = vpack.c.b16 %v116, %v114
    %v127 = vpack.c.b16 %v119, %v117
    %v128 = vpack.c.b16 %v120, %v118
    %vm137 = vcmask 523264
    %v139 = vsel %vm137, %v95, 0
    %v142 = vsel %vm137, %v96, 0
    %144 = vmatprep.subr.bf16.mxu0 %v122
    %145 = vmatpush1.bf16.msra.mxu0 %v121
    %146 = vmatprep.subr.bf16.mxu0 %v124
    %147 = vmatpush1.bf16.msra.mxu0 %v123
    %148 = vmatprep.subr.bf16.mxu0 %v126
    %149 = vmatpush1.bf16.msra.mxu0 %v125
    %150 = vmatprep.subr.bf16.mxu0 %v128
    %151 = vmatpush1.bf16.msra.mxu0 %v127
    %152 = vmatprep.subr.bf16.mxu0 0
    %153 = vmatpush1.bf16.msra.mxu0 0
    %154 = vmatprep.subr.bf16.mxu0 0
    %155 = vmatpush1.bf16.msra.mxu0 0
    %156 = vmatprep.subr.bf16.mxu0 0
    %157 = vmatpush1.bf16.msra.mxu0 0
    %158 = vmatprep.subr.bf16.mxu0 0
    %159 = vmatpush1.bf16.msra.mxu0 0
    %160 = vmatprep.subr.bf16.mxu0 0
    %161 = vmatpush1.bf16.msra.mxu0 0
    %162 = vmatprep.subr.bf16.mxu0 0
    %163 = vmatpush1.bf16.msra.mxu0 0
    %164 = vmatprep.subr.bf16.mxu0 0
    %165 = vmatpush1.bf16.msra.mxu0 0
    %166 = vmatprep.subr.bf16.mxu0 0
    %167 = vmatpush1.bf16.msra.mxu0 0
    %168 = vmatprep.subr.bf16.mxu0 0
    %169 = vmatpush1.bf16.msra.mxu0 0
    %170 = vmatprep.subr.bf16.mxu0 0
    %171 = vmatpush1.bf16.msra.mxu0 0
    %172 = vmatprep.subr.bf16.mxu0 0
    %173 = vmatpush1.bf16.msra.mxu0 0
    %174 = vmatprep.subr.bf16.mxu0 0
    %175 = vmatpush1.bf16.msra.mxu0 0
    %176 = vmatprep.mubr.bf16.mxu0 0
    %177 = vmatmul.mubr.bf16.gmra.mrb[0].mxu0 %v139
    %v178 = vpop.f32.mrb[0].mxu0
    %v179 = vadd.f32 %v80, %v178
    %v180 = vpop.f32.mrb[0].mxu0
    %v181 = vadd.f32 %v84, %v180
    %v182 = vpop.f32.mrb[0].mxu0
    %v183 = vadd.f32 %v80, %v182
    %v184 = vpop.f32.mrb[0].mxu0
    %v185 = vadd.f32 %v84, %v184
    %186 = vmatprep.mubr.bf16.mxu0 0
    %187 = vmatmul.mubr.bf16.gmra.mrb[0].mxu0 %v142
    %v188 = vpop.f32.mrb[0].mxu0
    %v189 = vadd.f32 %v80, %v188
    %v190 = vpop.f32.mrb[0].mxu0
    %v191 = vadd.f32 %v84, %v190
    %v192 = vpop.f32.mrb[0].mxu0
    %v193 = vadd.f32 %v80, %v192
    %v194 = vpop.f32.mrb[0].mxu0
    %v195 = vadd.f32 %v84, %v194
    %196 = vdwg.mxu0
    %v197 = vmax.f32 %v179, 0.0
    %v198 = vmax.f32 %v181, 0.0
    %v199 = vmax.f32 %v183, 0.0
    %v200 = vmax.f32 %v185, 0.0
    %v201 = vmax.f32 %v189, 0.0
    %v202 = vmax.f32 %v191, 0.0
    %v203 = vmax.f32 %v193, 0.0
    %v204 = vmax.f32 %v195, 0.0
    %v205 = vpack.c.bf16 %v199, %v197
    %v206 = vpack.c.bf16 %v200, %v198
    %v207 = vpack.c.bf16 %v203, %v201
    %v208 = vpack.c.bf16 %v204, %v202
    %v209 = vld [vmem:[#allocation7] sm:$0xff]
    %v210 = vld [vmem:[#allocation7 + $0x8] sm:$0xff]
    %v211 = vld [vmem:[#allocation7 + $0x10] sm:$0xff]
    %v212 = vld [vmem:[#allocation7 + $0x18] sm:$0xff]
    %v213 = vld [vmem:[#allocation7 + $0x20] sm:$0xff]
    %v214 = vld [vmem:[#allocation7 + $0x28] sm:$0xff]
    %v215 = vld [vmem:[#allocation7 + $0x30] sm:$0xff]
    %v216 = vld [vmem:[#allocation7 + $0x38] sm:$0xff]
    %v217 = vld [vmem:[#allocation7 + $0x40] sm:$0xff]
    %v218 = vld [vmem:[#allocation7 + $0x48] sm:$0xff]
    %v219 = vld [vmem:[#allocation7 + $0x50] sm:$0xff]
    %v220 = vld [vmem:[#allocation7 + $0x58] sm:$0xff]
    %v221 = vld [vmem:[#allocation7 + $0x60] sm:$0xff]
    %v222 = vld [vmem:[#allocation7 + $0x68] sm:$0xff]
    %v223 = vld [vmem:[#allocation7 + $0x70] sm:$0xff]
    %v224 = vld [vmem:[#allocation7 + $0x78] sm:$0xff]
    %v225 = vld [vmem:[#allocation7 + $0x80] sm:$0xff]
    %v226 = vld [vmem:[#allocation7 + $0x88] sm:$0xff]
    %v227 = vld [vmem:[#allocation7 + $0x90] sm:$0xff]
    %v228 = vld [vmem:[#allocation7 + $0x98] sm:$0xff]
    %v229 = vld [vmem:[#allocation7 + $0xa0] sm:$0xff]
    %v230 = vld [vmem:[#allocation7 + $0xa8] sm:$0xff]
    %v231 = vld [vmem:[#allocation7 + $0xb0] sm:$0xff]
    %v232 = vld [vmem:[#allocation7 + $0xb8] sm:$0xff]
    %v233 = vld [vmem:[#allocation7 + $0xc0] sm:$0xff]
    %v234 = vld [vmem:[#allocation7 + $0xc8] sm:$0xff]
    %v235 = vld [vmem:[#allocation7 + $0xd0] sm:$0xff]
    %v236 = vld [vmem:[#allocation7 + $0xd8] sm:$0xff]
    %v237 = vld [vmem:[#allocation7 + $0xe0] sm:$0xff]
    %v238 = vld [vmem:[#allocation7 + $0xe8] sm:$0xff]
    %v239 = vld [vmem:[#allocation7 + $0xf0] sm:$0xff]
    %v240 = vld [vmem:[#allocation7 + $0xf8] sm:$0xff]
    %v241 = vld [vmem:[%s4] sm:$0x3]
    %v243 = vlaneseq
    %v244 = vshrl.u32 %v243, 7
    %v245 = vsub.s32 0, %v244
    %v246 = vrot.slane %v241, %v245
    %v247 = vlaneseq
    %v248 = vshrl.u32 %v247, 7
    %v249 = vsub.s32 1, %v248
    %v250 = vrot.slane %v241, %v249
    %v285 = vunpack.c.l.b16 %v209
    %v286 = vunpack.c.h.b16 %v209
    %v287 = vunpack.c.l.b16 %v210
    %v288 = vunpack.c.h.b16 %v210
    %v289 = vunpack.c.l.b16 %v211
    %v290 = vunpack.c.h.b16 %v211
    %v291 = vunpack.c.l.b16 %v212
    %v292 = vunpack.c.h.b16 %v212
    %v293 = vunpack.c.l.b16 %v213
    %v294 = vunpack.c.h.b16 %v213
    %v295 = vunpack.c.l.b16 %v214
    %v296 = vunpack.c.h.b16 %v214
    %v297 = vunpack.c.l.b16 %v215
    %v298 = vunpack.c.h.b16 %v215
    %v299 = vunpack.c.l.b16 %v216
    %v300 = vunpack.c.h.b16 %v216
    %v301 = vunpack.c.l.b16 %v217
    %v302 = vunpack.c.h.b16 %v217
    %v303 = vunpack.c.l.b16 %v218
    %v304 = vunpack.c.h.b16 %v218
    %v305 = vunpack.c.l.b16 %v219
    %v306 = vunpack.c.h.b16 %v219
    %v307 = vunpack.c.l.b16 %v220
    %v308 = vunpack.c.h.b16 %v220
    %v309 = vunpack.c.l.b16 %v221
    %v310 = vunpack.c.h.b16 %v221
    %v311 = vunpack.c.l.b16 %v222
    %v312 = vunpack.c.h.b16 %v222
    %v313 = vunpack.c.l.b16 %v223
    %v314 = vunpack.c.h.b16 %v223
    %v315 = vunpack.c.l.b16 %v224
    %v316 = vunpack.c.h.b16 %v224
    %v317 = vunpack.c.l.b16 %v225
    %v318 = vunpack.c.h.b16 %v225
    %v319 = vunpack.c.l.b16 %v226
    %v320 = vunpack.c.h.b16 %v226
    %v321 = vunpack.c.l.b16 %v227
    %v322 = vunpack.c.h.b16 %v227
    %v323 = vunpack.c.l.b16 %v228
    %v324 = vunpack.c.h.b16 %v228
    %v325 = vunpack.c.l.b16 %v229
    %v326 = vunpack.c.h.b16 %v229
    %v327 = vunpack.c.l.b16 %v230
    %v328 = vunpack.c.h.b16 %v230
    %v329 = vunpack.c.l.b16 %v231
    %v330 = vunpack.c.h.b16 %v231
    %v331 = vunpack.c.l.b16 %v232
    %v332 = vunpack.c.h.b16 %v232
    %v333 = vunpack.c.l.b16 %v233
    %v334 = vunpack.c.h.b16 %v233
    %v335 = vunpack.c.l.b16 %v234
    %v336 = vunpack.c.h.b16 %v234
    %v337 = vunpack.c.l.b16 %v235
    %v338 = vunpack.c.h.b16 %v235
    %v339 = vunpack.c.l.b16 %v236
    %v340 = vunpack.c.h.b16 %v236
    %v341 = vunpack.c.l.b16 %v237
    %v342 = vunpack.c.h.b16 %v237
    %v343 = vunpack.c.l.b16 %v238
    %v344 = vunpack.c.h.b16 %v238
    %v345 = vunpack.c.l.b16 %v239
    %v346 = vunpack.c.h.b16 %v239
    %v347 = vunpack.c.l.b16 %v240
    %v348 = vunpack.c.h.b16 %v240
    %v349 = vpack.c.b16 %v287, %v285
    %v350 = vpack.c.b16 %v288, %v286
    %v351 = vpack.c.b16 %v291, %v289
    %v352 = vpack.c.b16 %v292, %v290
    %v353 = vpack.c.b16 %v295, %v293
    %v354 = vpack.c.b16 %v296, %v294
    %v355 = vpack.c.b16 %v299, %v297
    %v356 = vpack.c.b16 %v300, %v298
    %v357 = vpack.c.b16 %v303, %v301
    %v358 = vpack.c.b16 %v304, %v302
    %v359 = vpack.c.b16 %v307, %v305
    %v360 = vpack.c.b16 %v308, %v306
    %v361 = vpack.c.b16 %v311, %v309
    %v362 = vpack.c.b16 %v312, %v310
    %v363 = vpack.c.b16 %v315, %v313
    %v364 = vpack.c.b16 %v316, %v314
    %v365 = vpack.c.b16 %v319, %v317
    %v366 = vpack.c.b16 %v320, %v318
    %v367 = vpack.c.b16 %v323, %v321
    %v368 = vpack.c.b16 %v324, %v322
    %v369 = vpack.c.b16 %v327, %v325
    %v370 = vpack.c.b16 %v328, %v326
    %v371 = vpack.c.b16 %v331, %v329
    %v372 = vpack.c.b16 %v332, %v330
    %v373 = vpack.c.b16 %v335, %v333
    %v374 = vpack.c.b16 %v336, %v334
    %v375 = vpack.c.b16 %v339, %v337
    %v376 = vpack.c.b16 %v340, %v338
    %v377 = vpack.c.b16 %v343, %v341
    %v378 = vpack.c.b16 %v344, %v342
    %v379 = vpack.c.b16 %v347, %v345
    %v380 = vpack.c.b16 %v348, %v346
    %413 = vmatprep.subr.bf16.mxu0 %v350
    %414 = vmatpush1.bf16.msra.mxu0 %v349
    %415 = vmatprep.subr.bf16.mxu0 %v352
    %416 = vmatpush1.bf16.msra.mxu0 %v351
    %417 = vmatprep.subr.bf16.mxu0 %v354
    %418 = vmatpush1.bf16.msra.mxu0 %v353
    %419 = vmatprep.subr.bf16.mxu0 %v356
    %420 = vmatpush1.bf16.msra.mxu0 %v355
    %421 = vmatprep.subr.bf16.mxu0 %v358
    %422 = vmatpush1.bf16.msra.mxu0 %v357
    %423 = vmatprep.subr.bf16.mxu0 %v360
    %424 = vmatpush1.bf16.msra.mxu0 %v359
    %425 = vmatprep.subr.bf16.mxu0 %v362
    %426 = vmatpush1.bf16.msra.mxu0 %v361
    %427 = vmatprep.subr.bf16.mxu0 %v364
    %428 = vmatpush1.bf16.msra.mxu0 %v363
    %429 = vmatprep.subr.bf16.mxu0 %v366
    %430 = vmatpush1.bf16.msra.mxu0 %v365
    %431 = vmatprep.subr.bf16.mxu0 %v368
    %432 = vmatpush1.bf16.msra.mxu0 %v367
    %433 = vmatprep.subr.bf16.mxu0 %v370
    %434 = vmatpush1.bf16.msra.mxu0 %v369
    %435 = vmatprep.subr.bf16.mxu0 %v372
    %436 = vmatpush1.bf16.msra.mxu0 %v371
    %437 = vmatprep.subr.bf16.mxu0 %v374
    %438 = vmatpush1.bf16.msra.mxu0 %v373
    %439 = vmatprep.subr.bf16.mxu0 %v376
    %440 = vmatpush1.bf16.msra.mxu0 %v375
    %441 = vmatprep.subr.bf16.mxu0 %v378
    %442 = vmatpush1.bf16.msra.mxu0 %v377
    %443 = vmatprep.subr.bf16.mxu0 %v380
    %444 = vmatpush1.bf16.msra.mxu0 %v379
    %445 = vmatprep.mubr.bf16.mxu0 %v206
    %446 = vmatmul.mubr.bf16.gmra.mrb[0].mxu0 %v205
    %v447 = vpop.f32.mrb[0].mxu0
    %v448 = vadd.f32 %v246, %v447
    %v449 = vpop.f32.mrb[0].mxu0
    %v450 = vadd.f32 %v250, %v449
    %v451 = vpop.f32.mrb[0].mxu0
    %v452 = vadd.f32 %v246, %v451
    %v453 = vpop.f32.mrb[0].mxu0
    %v454 = vadd.f32 %v250, %v453
    %455 = vmatprep.mubr.bf16.mxu0 %v208
    %456 = vmatmul.mubr.bf16.gmra.mrb[0].mxu0 %v207
    %v457 = vpop.f32.mrb[0].mxu0
    %v458 = vadd.f32 %v246, %v457
    %v459 = vpop.f32.mrb[0].mxu0
    %v460 = vadd.f32 %v250, %v459
    %v461 = vpop.f32.mrb[0].mxu0
    %v462 = vadd.f32 %v246, %v461
    %v463 = vpop.f32.mrb[0].mxu0
    %v464 = vadd.f32 %v250, %v463
    %465 = vdwg.mxu0
    %v466 = vmax.f32 %v448, 0.0
    %v467 = vmax.f32 %v450, 0.0
    %v468 = vmax.f32 %v452, 0.0
    %v469 = vmax.f32 %v454, 0.0
    %v470 = vmax.f32 %v458, 0.0
    %v471 = vmax.f32 %v460, 0.0
    %v472 = vmax.f32 %v462, 0.0
    %v473 = vmax.f32 %v464, 0.0
    %v474 = vpack.c.bf16 %v468, %v466
    %v475 = vpack.c.bf16 %v469, %v467
    %v476 = vpack.c.bf16 %v472, %v470
    %v477 = vpack.c.bf16 %v473, %v471
    %v482 = vunpack.c.l.b16 %v474
    %v483 = vunpack.c.l.b16 %v475
    %v484 = vunpack.c.h.b16 %v474
    %v485 = vunpack.c.h.b16 %v475
    %v486 = vunpack.c.l.b16 %v476
    %v487 = vunpack.c.l.b16 %v477
    %v488 = vunpack.c.h.b16 %v476
    %v489 = vunpack.c.h.b16 %v477
    %v490 = vpack.c.b16 %v483, %v482
    %v491 = vpack.c.b16 %v485, %v484
    %v492 = vpack.c.b16 %v487, %v486
    %v493 = vpack.c.b16 %v489, %v488
    %498 = vst [vmem:[#allocation8] sm:$0xff] %v490
    %499 = vst [vmem:[#allocation8 + $0x8] sm:$0xff] %v491
    %500 = vst [vmem:[#allocation8 + $0x10] sm:$0xff] %v492
    %501 = vst [vmem:[#allocation8 + $0x18] sm:$0xff] %v493
    // Predicated region
    $region34: #{tpu_custom_call.1} parent=1 // pred_check
      _
    $region35: #{tpu_custom_call.1} parent=1 // pred_check_branch
      %503 = sbr.rel (0) target = $region37
    $region36: #{tpu_custom_call.1} parent=1 // pred_region
      %s505 = ssub.s32 512, 512
      %506 = vsyncadd [#allocation4], %s505
      %s507 = sshll.u32 [#allocation8], 4
      %s508 = int_to_ptr.vmem [resolvable:$true] %s507
      %513 = dma.vmem_to_hbm [thread:$0]  %s508, 512, %s5, [#allocation4], 128, 128, 8
    $region37: #{tpu_custom_call.1} parent=1 // pred_fallthru
      _
    // Predicated region
    $region38: #{tpu_custom_call.1} parent=1 // pred_check
      _
    $region39: #{tpu_custom_call.1} parent=1 // pred_check_branch
      %515 = sbr.rel (0) target = $region41
    $region40: #{tpu_custom_call.1} parent=1 // pred_region
      %516 = dma.done [#allocation4], 512
    $region41: #{tpu_custom_call.1} parent=1 // pred_fallthru
      _
    %517 = vsyncpa [#allocation3], 1
    %518 = vsyncpa [#allocation6], 1
    %519 = vsyncpa [#allocation4], 1

</llo_original>
